<compile_context>
chip_gen: v7x
topology: tpu7x:2x2x1
jax: 0.10.0
libtpu: 0.0.40
codegen_flags: <defaults>
</compile_context>

<pallas_src>
import functools
import math

import jax
import jax.numpy as jnp
from jax.experimental import pallas as pl
from jax.experimental.pallas import tpu as pltpu


def _mlp_kernel(x_ref,
                w1_ref, b1_ref,
                w2_ref, b2_ref,
                w3_ref, b3_ref,
                w4_ref, b4_ref,
                out_ref):
    # Layer 1: Linear (BN folded) -> ReLU
    h = jnp.dot(x_ref[...].astype(jnp.bfloat16), w1_ref[...],
                preferred_element_type=jnp.float32)
    h = jnp.maximum(h + b1_ref[...], 0.0)

    # Layer 2: Linear (BN folded) -> ReLU   (dropout = identity in eval)
    h = jnp.dot(h.astype(jnp.bfloat16), w2_ref[...],
                preferred_element_type=jnp.float32)
    h = jnp.maximum(h + b2_ref[...], 0.0)

    # Layer 3: Linear (BN folded) -> ReLU   (dropout = identity in eval)
    h = jnp.dot(h.astype(jnp.bfloat16), w3_ref[...],
                preferred_element_type=jnp.float32)
    h = jnp.maximum(h + b3_ref[...], 0.0)

    # Output layer: Linear only (columns padded to 128 lanes).
    h = jnp.dot(h.astype(jnp.bfloat16), w4_ref[...],
                preferred_element_type=jnp.float32)
    out_ref[...] = (h + b4_ref[...]).astype(out_ref.dtype)


def _round_up(n, m):
    return ((n + m - 1) // m) * m


@functools.partial(jax.jit, static_argnames=("num_class", "block_b"))
def multiclass_classification_forward(x, params, num_class, block_b=512):
    """x: [B, num_feature] f32. params: folded/padded weights from init_params."""
    B, F = x.shape
    nc_pad = params["w4"].shape[1]

    # Batch tile: big tiles for serving batches, but never larger than (padded) B.
    tb = min(block_b, _round_up(B, 8))
    b_pad = _round_up(B, tb)
    if b_pad != B:
        x = jnp.pad(x, ((0, b_pad - B), (0, 0)))
    grid = (pl.cdiv(b_pad, tb),)

    def resident(shape):
        # Whole array as one block, same block every grid step -> stays in VMEM.
        return pl.BlockSpec(shape, lambda i: (0, 0))

    in_specs = [
        pl.BlockSpec((tb, F), lambda i: (i, 0)),            # x: tiled over batch
        resident(params["w1"].shape), resident(params["b1"].shape),
        resident(params["w2"].shape), resident(params["b2"].shape),
        resident(params["w3"].shape), resident(params["b3"].shape),
        resident(params["w4"].shape), resident(params["b4"].shape),
    ]

    out = pl.pallas_call(
        _mlp_kernel,
        out_shape=jax.ShapeDtypeStruct((b_pad, nc_pad), jnp.float32),
        grid=grid,
        in_specs=in_specs,
        out_specs=pl.BlockSpec((tb, nc_pad), lambda i: (i, 0)),
        compiler_params=pltpu.CompilerParams(
            dimension_semantics=("parallel",)),                 # 2 TCs on v7x
    )(x,
      params["w1"], params["b1"],
      params["w2"], params["b2"],
      params["w3"], params["b3"],
      params["w4"], params["b4"])

    return out[:B, :num_class]


def init_params(key, num_feature, num_class, eps=1e-5):
    """Synthetic params mirroring PyTorch shapes, with eval-mode BN folded in,
    weights cast to bf16, and the output layer padded to 128 lanes."""
    dims = [num_feature, 512, 128, 64, num_class]
    keys = jax.random.split(key, 8)
    params = {}
    for i in range(4):
        fan_in, fan_out = dims[i], dims[i + 1]
        bound = 1.0 / math.sqrt(fan_in)
        # Stored as [in, out] (transpose of torch's [out, in]) for x @ W.
        params[f"w{i+1}"] = jax.random.uniform(
            keys[2 * i], (fan_in, fan_out), jnp.float32, -bound, bound)
        params[f"b{i+1}"] = jax.random.uniform(
            keys[2 * i + 1], (1, fan_out), jnp.float32, -bound, bound)

    # Fold eval-mode BatchNorm1d (PyTorch defaults: gamma=1, beta=0,
    # running_mean=0, running_var=1) into the preceding linear layer:
    #   BN(xW + b) = xW*s + (b*s + t),  s = gamma/sqrt(var+eps),  t = beta - mean*s
    for i, h in zip((1, 2, 3), (512, 128, 64)):
        gamma = jnp.ones((1, h), jnp.float32)
        beta = jnp.zeros((1, h), jnp.float32)
        running_mean = jnp.zeros((1, h), jnp.float32)
        running_var = jnp.ones((1, h), jnp.float32)
        scale = gamma / jnp.sqrt(running_var + eps)
        shift = beta - running_mean * scale
        params[f"w{i}"] = params[f"w{i}"] * scale           # per-output-column scale
        params[f"b{i}"] = params[f"b{i}"] * scale + shift

    # Pad the output layer to a lane-dense 128-wide store; wrapper slices back.
    nc_pad = _round_up(max(num_class, 1), 128)
    if nc_pad != num_class:
        params["w4"] = jnp.pad(params["w4"], ((0, 0), (0, nc_pad - num_class)))
        params["b4"] = jnp.pad(params["b4"], ((0, 0), (0, nc_pad - num_class)))

    # Weights in bf16 for the MXU (f32 accumulation in-kernel); biases stay f32.
    for i in range(1, 5):
        params[f"w{i}"] = params[f"w{i}"].astype(jnp.bfloat16)
    return params


if __name__ == "__main__":
    B = 16
    NUM_FEATURE = 32
    NUM_CLASS = 8

    key = jax.random.PRNGKey(0)
    k_x, k_p = jax.random.split(key)
    x = jax.random.normal(k_x, (B, NUM_FEATURE), jnp.float32)
    params = init_params(k_p, NUM_FEATURE, NUM_CLASS)

    out = multiclass_classification_forward(x, params, NUM_CLASS)
    jax.block_until_ready(out)
    assert out.shape == (B, NUM_CLASS), out.shape
    assert bool(jnp.all(jnp.isfinite(out)))
    print("KERNEL_OK")
</pallas_src>

<mosaic_0001>
module attributes {stable_mosaic.version = 11 : i64} {
  func.func @_mlp_kernel(%arg0: i32, %arg1: memref<16x32xf32, #tpu.memory_space<vmem>>, %arg2: memref<32x512xbf16, #tpu.memory_space<vmem>>, %arg3: memref<1x512xf32, #tpu.memory_space<vmem>>, %arg4: memref<512x128xbf16, #tpu.memory_space<vmem>>, %arg5: memref<1x128xf32, #tpu.memory_space<vmem>>, %arg6: memref<128x64xbf16, #tpu.memory_space<vmem>>, %arg7: memref<1x64xf32, #tpu.memory_space<vmem>>, %arg8: memref<64x128xbf16, #tpu.memory_space<vmem>>, %arg9: memref<1x128xf32, #tpu.memory_space<vmem>>, %arg10: memref<16x128xf32, #tpu.memory_space<vmem>>) attributes {dimension_semantics = [#tpu.dimension_semantics<parallel>], iteration_bounds = array<i64: 1>, scalar_prefetch = 0 : i64, scratch_operands = 0 : i64, tpu.core_type = #tpu.core_type<tc>, window_params = [{transform_indices = @transform_0, window_bounds = array<i64: 16, 32>}, {pipeline_mode = #tpu.pipeline_mode<synchronous>, transform_indices = @transform_1, window_bounds = array<i64: 32, 512>}, {pipeline_mode = #tpu.pipeline_mode<synchronous>, transform_indices = @transform_2, window_bounds = array<i64: 1, 512>}, {pipeline_mode = #tpu.pipeline_mode<synchronous>, transform_indices = @transform_3, window_bounds = array<i64: 512, 128>}, {pipeline_mode = #tpu.pipeline_mode<synchronous>, transform_indices = @transform_4, window_bounds = array<i64: 1, 128>}, {pipeline_mode = #tpu.pipeline_mode<synchronous>, transform_indices = @transform_5, window_bounds = array<i64: 128, 64>}, {pipeline_mode = #tpu.pipeline_mode<synchronous>, transform_indices = @transform_6, window_bounds = array<i64: 1, 64>}, {pipeline_mode = #tpu.pipeline_mode<synchronous>, transform_indices = @transform_7, window_bounds = array<i64: 64, 128>}, {pipeline_mode = #tpu.pipeline_mode<synchronous>, transform_indices = @transform_8, window_bounds = array<i64: 1, 128>}, {transform_indices = @transform_9, window_bounds = array<i64: 16, 128>}]} {
    %c0 = arith.constant 0 : index
    %c0_0 = arith.constant 0 : index
    %0 = vector.load %arg1[%c0, %c0_0] : memref<16x32xf32, #tpu.memory_space<vmem>>, vector<16x32xf32>
    %1 = arith.truncf %0 : vector<16x32xf32> to vector<16x32xbf16>
    %c0_1 = arith.constant 0 : index
    %c0_2 = arith.constant 0 : index
    %2 = vector.load %arg2[%c0_1, %c0_2] : memref<32x512xbf16, #tpu.memory_space<vmem>>, vector<32x512xbf16>
    %cst = arith.constant dense<0.000000e+00> : vector<16x512xf32>
    %3 = tpu.matmul %1, %2, %cst {dimension_numbers = #tpu.dot_dimension_numbers<[1], [0], [0], [1], [0, 0, 1, 1], [], []>} : vector<16x32xbf16>, vector<32x512xbf16>, vector<16x512xf32> -> vector<16x512xf32>
    %c0_3 = arith.constant 0 : index
    %c0_4 = arith.constant 0 : index
    %4 = vector.load %arg3[%c0_3, %c0_4] : memref<1x512xf32, #tpu.memory_space<vmem>>, vector<1x512xf32>
    %5 = vector.broadcast %4 : vector<1x512xf32> to vector<16x512xf32>
    %6 = arith.addf %3, %5 : vector<16x512xf32>
    %cst_5 = arith.constant 0.000000e+00 : f32
    %7 = vector.broadcast %cst_5 : f32 to vector<16x512xf32>
    %8 = arith.maximumf %6, %7 : vector<16x512xf32>
    %9 = arith.truncf %8 : vector<16x512xf32> to vector<16x512xbf16>
    %c0_6 = arith.constant 0 : index
    %c0_7 = arith.constant 0 : index
    %10 = vector.load %arg4[%c0_6, %c0_7] : memref<512x128xbf16, #tpu.memory_space<vmem>>, vector<512x128xbf16>
    %cst_8 = arith.constant dense<0.000000e+00> : vector<16x128xf32>
    %11 = tpu.matmul %9, %10, %cst_8 {dimension_numbers = #tpu.dot_dimension_numbers<[1], [0], [0], [1], [0, 0, 1, 1], [], []>} : vector<16x512xbf16>, vector<512x128xbf16>, vector<16x128xf32> -> vector<16x128xf32>
    %c0_9 = arith.constant 0 : index
    %c0_10 = arith.constant 0 : index
    %12 = vector.load %arg5[%c0_9, %c0_10] : memref<1x128xf32, #tpu.memory_space<vmem>>, vector<1x128xf32>
    %13 = vector.broadcast %12 : vector<1x128xf32> to vector<16x128xf32>
    %14 = arith.addf %11, %13 : vector<16x128xf32>
    %cst_11 = arith.constant 0.000000e+00 : f32
    %15 = vector.broadcast %cst_11 : f32 to vector<16x128xf32>
    %16 = arith.maximumf %14, %15 : vector<16x128xf32>
    %17 = arith.truncf %16 : vector<16x128xf32> to vector<16x128xbf16>
    %c0_12 = arith.constant 0 : index
    %c0_13 = arith.constant 0 : index
    %18 = vector.load %arg6[%c0_12, %c0_13] : memref<128x64xbf16, #tpu.memory_space<vmem>>, vector<128x64xbf16>
    %cst_14 = arith.constant dense<0.000000e+00> : vector<16x64xf32>
    %19 = tpu.matmul %17, %18, %cst_14 {dimension_numbers = #tpu.dot_dimension_numbers<[1], [0], [0], [1], [0, 0, 1, 1], [], []>} : vector<16x128xbf16>, vector<128x64xbf16>, vector<16x64xf32> -> vector<16x64xf32>
    %c0_15 = arith.constant 0 : index
    %c0_16 = arith.constant 0 : index
    %20 = vector.load %arg7[%c0_15, %c0_16] : memref<1x64xf32, #tpu.memory_space<vmem>>, vector<1x64xf32>
    %21 = vector.broadcast %20 : vector<1x64xf32> to vector<16x64xf32>
    %22 = arith.addf %19, %21 : vector<16x64xf32>
    %cst_17 = arith.constant 0.000000e+00 : f32
    %23 = vector.broadcast %cst_17 : f32 to vector<16x64xf32>
    %24 = arith.maximumf %22, %23 : vector<16x64xf32>
    %25 = arith.truncf %24 : vector<16x64xf32> to vector<16x64xbf16>
    %c0_18 = arith.constant 0 : index
    %c0_19 = arith.constant 0 : index
    %26 = vector.load %arg8[%c0_18, %c0_19] : memref<64x128xbf16, #tpu.memory_space<vmem>>, vector<64x128xbf16>
    %cst_20 = arith.constant dense<0.000000e+00> : vector<16x128xf32>
    %27 = tpu.matmul %25, %26, %cst_20 {dimension_numbers = #tpu.dot_dimension_numbers<[1], [0], [0], [1], [0, 0, 1, 1], [], []>} : vector<16x64xbf16>, vector<64x128xbf16>, vector<16x128xf32> -> vector<16x128xf32>
    %c0_21 = arith.constant 0 : index
    %c0_22 = arith.constant 0 : index
    %28 = vector.load %arg9[%c0_21, %c0_22] : memref<1x128xf32, #tpu.memory_space<vmem>>, vector<1x128xf32>
    %29 = vector.broadcast %28 : vector<1x128xf32> to vector<16x128xf32>
    %30 = arith.addf %27, %29 : vector<16x128xf32>
    %c0_23 = arith.constant 0 : index
    %c0_24 = arith.constant 0 : index
    %31 = vector.load %arg10[%c0_23, %c0_24] : memref<16x128xf32, #tpu.memory_space<vmem>>, vector<16x128xf32>
    tpu.vector_store %arg10[%c0_23, %c0_24], %30 {strides = array<i32>} : memref<16x128xf32, #tpu.memory_space<vmem>>, vector<16x128xf32>,
    return
  }
  func.func @transform_0(%arg0: i32) -> (i32, i32) {
    %c0_i32 = arith.constant 0 : i32
    %c0_i32_0 = arith.constant 0 : i32
    return %arg0, %c0_i32 : i32, i32
  }
  func.func @transform_1(%arg0: i32) -> (i32, i32) {
    %c0_i32 = arith.constant 0 : i32
    %c0_i32_0 = arith.constant 0 : i32
    %c0_i32_1 = arith.constant 0 : i32
    return %c0_i32, %c0_i32_0 : i32, i32
  }
  func.func @transform_2(%arg0: i32) -> (i32, i32) {
    %c0_i32 = arith.constant 0 : i32
    %c0_i32_0 = arith.constant 0 : i32
    %c0_i32_1 = arith.constant 0 : i32
    return %c0_i32, %c0_i32_0 : i32, i32
  }
  func.func @transform_3(%arg0: i32) -> (i32, i32) {
    %c0_i32 = arith.constant 0 : i32
    %c0_i32_0 = arith.constant 0 : i32
    %c0_i32_1 = arith.constant 0 : i32
    return %c0_i32, %c0_i32_0 : i32, i32
  }
  func.func @transform_4(%arg0: i32) -> (i32, i32) {
    %c0_i32 = arith.constant 0 : i32
    %c0_i32_0 = arith.constant 0 : i32
    %c0_i32_1 = arith.constant 0 : i32
    return %c0_i32, %c0_i32_0 : i32, i32
  }
  func.func @transform_5(%arg0: i32) -> (i32, i32) {
    %c0_i32 = arith.constant 0 : i32
    %c0_i32_0 = arith.constant 0 : i32
    %c0_i32_1 = arith.constant 0 : i32
    return %c0_i32, %c0_i32_0 : i32, i32
  }
  func.func @transform_6(%arg0: i32) -> (i32, i32) {
    %c0_i32 = arith.constant 0 : i32
    %c0_i32_0 = arith.constant 0 : i32
    %c0_i32_1 = arith.constant 0 : i32
    return %c0_i32, %c0_i32_0 : i32, i32
  }
  func.func @transform_7(%arg0: i32) -> (i32, i32) {
    %c0_i32 = arith.constant 0 : i32
    %c0_i32_0 = arith.constant 0 : i32
    %c0_i32_1 = arith.constant 0 : i32
    return %c0_i32, %c0_i32_0 : i32, i32
  }
  func.func @transform_8(%arg0: i32) -> (i32, i32) {
    %c0_i32 = arith.constant 0 : i32
    %c0_i32_0 = arith.constant 0 : i32
    %c0_i32_1 = arith.constant 0 : i32
    return %c0_i32, %c0_i32_0 : i32, i32
  }
  func.func @transform_9(%arg0: i32) -> (i32, i32) {
    %c0_i32 = arith.constant 0 : i32
    %c0_i32_0 = arith.constant 0 : i32
    return %arg0, %c0_i32 : i32, i32
  }
}

</mosaic_0001>

<llo_original>
// kernel: multiclass_classification_forward.1
$region0: #{multiclass_classification_forward.1}
  #allocation0 [shape = 'u32[]', space=smem, size = 0x4, offset = 0x4, fixed_abs, tag = 'smem constant byte address 0x4 - core index']
  #allocation1 [shape = 'u32[144,128]{1,0:T(1,128)}', space=vmem, size = 0x12000, scoped, tag = 'internal scratch']
  %s0 = inlined_call_operand.vmem [shape: f32[16,32], index: 0, kind: input, shape index: {}]
  %s1 = inlined_call_operand.vmem [shape: bf16[32,512], index: 1, kind: input, shape index: {}]
  %s2 = inlined_call_operand.hbm [shape: f32[1,512], index: 2, kind: input, shape index: {}]
  %s3 = inlined_call_operand.hbm [shape: bf16[512,128], index: 3, kind: input, shape index: {}]
  %s4 = inlined_call_operand.vmem [shape: f32[1,128], index: 4, kind: input, shape index: {}]
  %s5 = inlined_call_operand.vmem [shape: bf16[128,64], index: 5, kind: input, shape index: {}]
  %s6 = inlined_call_operand.vmem [shape: f32[1,64], index: 6, kind: input, shape index: {}]
  %s7 = inlined_call_operand.vmem [shape: bf16[64,128], index: 7, kind: input, shape index: {}]
  %s8 = inlined_call_operand.hbm [shape: f32[1,128], index: 8, kind: input, shape index: {}]
  %s9 = inlined_call_operand.vmem [shape: f32[16,128], index: 9, kind: output, shape index: {}]
  %s10 = sld [smem:[#allocation0]]
  $region58: #{multiclass_classification_forward.1} parent=0
    _
  %s12 = ssub.s32 1, %s10
  %s13 = scalar_select 0, %s12, %s10
  $region1: #{multiclass_classification_forward.1} parent=0
    #allocation2 [shape = 'u8[2048]{0}', space=vmem, size = 0x800, scoped, tag = 'input window, operand 2, single buffered']
    #allocation3 [shape = 's32[1]{0}', space=sflag, size = 0x4, scoped, tag = 'scoped memory for multiclass_classification_forward.1']
    #allocation4 [shape = 'u8[131072]{0}', space=vmem, size = 0x20000, scoped, tag = 'input window, operand 3, single buffered']
    #allocation5 [shape = 's32[1]{0}', space=sflag, size = 0x4, scoped, tag = 'scoped memory for multiclass_classification_forward.1']
    #allocation6 [shape = 'u8[512]{0}', space=vmem, size = 0x400, scoped, tag = 'input window, operand 8, single buffered']
    %14 = vsyncpa [#allocation3], 0
    %15 = vsyncpa [#allocation5], 0
    // Predicated region
    $region2: #{multiclass_classification_forward.1} parent=1 // pred_check
      _
    $region3: #{multiclass_classification_forward.1} parent=1 // pred_check_branch
      %17 = sbr.rel (0) target = $region5
    $region4: #{multiclass_classification_forward.1} parent=1 // pred_region
      _
    $region5: #{multiclass_classification_forward.1} parent=1 // pred_fallthru
      _
    // Predicated region
    $region6: #{multiclass_classification_forward.1} parent=1 // pred_check
      _
    $region7: #{multiclass_classification_forward.1} parent=1 // pred_check_branch
      %19 = sbr.rel (0) target = $region9
    $region8: #{multiclass_classification_forward.1} parent=1 // pred_region
      _
    $region9: #{multiclass_classification_forward.1} parent=1 // pred_fallthru
      _
    // Predicated region
    $region10: #{multiclass_classification_forward.1} parent=1 // pred_check
      _
    $region11: #{multiclass_classification_forward.1} parent=1 // pred_check_branch
      %21 = sbr.rel (0) target = $region13
    $region12: #{multiclass_classification_forward.1} parent=1 // pred_region
      %s23 = ssub.s32 64, 64
      %24 = vsyncadd [#allocation3], %s23
      %s26 = sshll.u32 [#allocation2], 4
      %s27 = int_to_ptr.vmem [resolvable:$true] %s26
      %29 = dma.hbm_to_vmem [thread:$0]  %s2, 64, %s27, [#allocation3]
    $region13: #{multiclass_classification_forward.1} parent=1 // pred_fallthru
      _
    // Predicated region
    $region14: #{multiclass_classification_forward.1} parent=1 // pred_check
      _
    $region15: #{multiclass_classification_forward.1} parent=1 // pred_check_branch
      %31 = sbr.rel (0) target = $region17
    $region16: #{multiclass_classification_forward.1} parent=1 // pred_region
      %s33 = ssub.s32 4096, 4096
      %34 = vsyncadd [#allocation5], %s33
      %s35 = sshll.u32 [#allocation4], 4
      %s36 = int_to_ptr.vmem [resolvable:$true] %s35
      %41 = dma.hbm_to_vmem [thread:$0]  %s3, 4096, %s36, [#allocation5], 64, 64, 4
    $region17: #{multiclass_classification_forward.1} parent=1 // pred_fallthru
      _
    // Predicated region
    $region18: #{multiclass_classification_forward.1} parent=1 // pred_check
      _
    $region19: #{multiclass_classification_forward.1} parent=1 // pred_check_branch
      %43 = sbr.rel (0) target = $region21
    $region20: #{multiclass_classification_forward.1} parent=1 // pred_region
      _
    $region21: #{multiclass_classification_forward.1} parent=1 // pred_fallthru
      _
    // Predicated region
    $region22: #{multiclass_classification_forward.1} parent=1 // pred_check
      _
    $region23: #{multiclass_classification_forward.1} parent=1 // pred_check_branch
      %45 = sbr.rel (0) target = $region25
    $region24: #{multiclass_classification_forward.1} parent=1 // pred_region
      _
    $region25: #{multiclass_classification_forward.1} parent=1 // pred_fallthru
      _
    // Predicated region
    $region26: #{multiclass_classification_forward.1} parent=1 // pred_check
      _
    $region27: #{multiclass_classification_forward.1} parent=1 // pred_check_branch
      %47 = sbr.rel (0) target = $region29
    $region28: #{multiclass_classification_forward.1} parent=1 // pred_region
      _
    $region29: #{multiclass_classification_forward.1} parent=1 // pred_fallthru
      _
    // Predicated region
    $region30: #{multiclass_classification_forward.1} parent=1 // pred_check
      _
    $region31: #{multiclass_classification_forward.1} parent=1 // pred_check_branch
      %49 = sbr.rel (0) target = $region33
    $region32: #{multiclass_classification_forward.1} parent=1 // pred_region
      _
    $region33: #{multiclass_classification_forward.1} parent=1 // pred_fallthru
      _
    // Predicated region
    $region34: #{multiclass_classification_forward.1} parent=1 // pred_check
      _
    $region35: #{multiclass_classification_forward.1} parent=1 // pred_check_branch
      %51 = sbr.rel (0) target = $region37
    $region36: #{multiclass_classification_forward.1} parent=1 // pred_region
      %s53 = ssub.s32 16, 16
      %54 = vsyncadd [#allocation5], %s53
      %s56 = sshll.u32 [#allocation6], 4
      %s57 = int_to_ptr.vmem [resolvable:$true] %s56
      %59 = dma.hbm_to_vmem [thread:$0]  %s8, 16, %s57, [#allocation5]
    $region37: #{multiclass_classification_forward.1} parent=1 // pred_fallthru
      _
    // Predicated region
    $region38: #{multiclass_classification_forward.1} parent=1 // pred_check
      _
    $region39: #{multiclass_classification_forward.1} parent=1 // pred_check_branch
      %61 = sbr.rel (0) target = $region41
    $region40: #{multiclass_classification_forward.1} parent=1 // pred_region
      %62 = dma.done [#allocation3], 64
    $region41: #{multiclass_classification_forward.1} parent=1 // pred_fallthru
      _
    // Predicated region
    $region42: #{multiclass_classification_forward.1} parent=1 // pred_check
      _
    $region43: #{multiclass_classification_forward.1} parent=1 // pred_check_branch
      %64 = sbr.rel (0) target = $region45
    $region44: #{multiclass_classification_forward.1} parent=1 // pred_region
      %65 = dma.done [#allocation5], 4096
    $region45: #{multiclass_classification_forward.1} parent=1 // pred_fallthru
      _
    // Predicated region
    $region46: #{multiclass_classification_forward.1} parent=1 // pred_check
      _
    $region47: #{multiclass_classification_forward.1} parent=1 // pred_check_branch
      %67 = sbr.rel (0) target = $region49
    $region48: #{multiclass_classification_forward.1} parent=1 // pred_region
      %68 = dma.done [#allocation5], 16
    $region49: #{multiclass_classification_forward.1} parent=1 // pred_fallthru
      _
    %v70 = vld [vmem:[%s0] sm:$0xff]
    %v71 = vld [vmem:[%s0 + $0x8] sm:$0xff]
    %v72 = vpack.c.bf16 %v71, %v70
    %v73 = vld [vmem:[%s1] sm:$0xff]
    %v74 = vld [vmem:[%s1 + $0x8] sm:$0xff]
    %v75 = vld [vmem:[%s1 + $0x10] sm:$0xff]
    %v76 = vld [vmem:[%s1 + $0x18] sm:$0xff]
    %v77 = vld [vmem:[%s1 + $0x20] sm:$0xff]
    %v78 = vld [vmem:[%s1 + $0x28] sm:$0xff]
    %v79 = vld [vmem:[%s1 + $0x30] sm:$0xff]
    %v80 = vld [vmem:[%s1 + $0x38] sm:$0xff]
    %v81 = vld [vmem:[#allocation2] sm:$0xf]
    %v83 = vlaneseq
    %v84 = vshrl.u32 %v83, 7
    %v85 = vsub.s32 0, %v84
    %v86 = vrot.slane %v81, %v85
    %v87 = vlaneseq
    %v88 = vshrl.u32 %v87, 7
    %v89 = vsub.s32 1, %v88
    %v90 = vrot.slane %v81, %v89
    %v91 = vlaneseq
    %v92 = vshrl.u32 %v91, 7
    %v93 = vsub.s32 2, %v92
    %v94 = vrot.slane %v81, %v93
    %v95 = vlaneseq
    %v96 = vshrl.u32 %v95, 7
    %v97 = vsub.s32 3, %v96
    %v98 = vrot.slane %v81, %v97
    %v111 = vunpack.c.l.b16 %v73
    %v112 = vunpack.c.h.b16 %v73
    %v113 = vunpack.c.l.b16 %v74
    %v114 = vunpack.c.h.b16 %v74
    %v115 = vunpack.c.l.b16 %v75
    %v116 = vunpack.c.h.b16 %v75
    %v117 = vunpack.c.l.b16 %v76
    %v118 = vunpack.c.h.b16 %v76
    %v119 = vunpack.c.l.b16 %v77
    %v120 = vunpack.c.h.b16 %v77
    %v121 = vunpack.c.l.b16 %v78
    %v122 = vunpack.c.h.b16 %v78
    %v123 = vunpack.c.l.b16 %v79
    %v124 = vunpack.c.h.b16 %v79
    %v125 = vunpack.c.l.b16 %v80
    %v126 = vunpack.c.h.b16 %v80
    %v127 = vpack.c.b16 %v115, %v111
    %v128 = vpack.c.b16 %v116, %v112
    %v129 = vpack.c.b16 %v117, %v113
    %v130 = vpack.c.b16 %v118, %v114
    %v131 = vpack.c.b16 %v123, %v119
    %v132 = vpack.c.b16 %v124, %v120
    %v133 = vpack.c.b16 %v125, %v121
    %v134 = vpack.c.b16 %v126, %v122
    %vm143 = vcmask 261120
    %v145 = vsel %vm143, %v72, 0
    %147 = vmatprep.subr.bf16.mxu0 %v128
    %148 = vmatpush1.bf16.msra.mxu0 %v127
    %149 = vmatprep.subr.bf16.mxu0 %v132
    %150 = vmatpush1.bf16.msra.mxu0 %v131
    %151 = vmatprep.subr.bf16.mxu0 0
    %152 = vmatpush1.bf16.msra.mxu0 0
    %153 = vmatprep.subr.bf16.mxu0 0
    %154 = vmatpush1.bf16.msra.mxu0 0
    %155 = vmatprep.subr.bf16.mxu0 0
    %156 = vmatpush1.bf16.msra.mxu0 0
    %157 = vmatprep.subr.bf16.mxu0 0
    %158 = vmatpush1.bf16.msra.mxu0 0
    %159 = vmatprep.subr.bf16.mxu0 0
    %160 = vmatpush1.bf16.msra.mxu0 0
    %161 = vmatprep.subr.bf16.mxu0 0
    %162 = vmatpush1.bf16.msra.mxu0 0
    %163 = vmatprep.subr.bf16.mxu0 0
    %164 = vmatpush1.bf16.msra.mxu0 0
    %165 = vmatprep.subr.bf16.mxu0 0
    %166 = vmatpush1.bf16.msra.mxu0 0
    %167 = vmatprep.subr.bf16.mxu0 0
    %168 = vmatpush1.bf16.msra.mxu0 0
    %169 = vmatprep.subr.bf16.mxu0 0
    %170 = vmatpush1.bf16.msra.mxu0 0
    %171 = vmatprep.subr.bf16.mxu0 0
    %172 = vmatpush1.bf16.msra.mxu0 0
    %173 = vmatprep.subr.bf16.mxu0 0
    %174 = vmatpush1.bf16.msra.mxu0 0
    %175 = vmatprep.subr.bf16.mxu0 0
    %176 = vmatpush1.bf16.msra.mxu0 0
    %177 = vmatprep.subr.bf16.mxu0 0
    %178 = vmatpush1.bf16.msra.mxu0 0
    %179 = vmatprep.mubr.bf16.mxu0 0
    %180 = vmatmul.mubr.bf16.gmra.mrb[0].mxu0 %v145
    %v181 = vpop.f32.mrb[0].mxu0
    %v182 = vadd.f32 %v86, %v181
    %v183 = vpop.f32.mrb[0].mxu0
    %v184 = vadd.f32 %v90, %v183
    %v185 = vpop.f32.mrb[0].mxu0
    %v186 = vadd.f32 %v86, %v185
    %v187 = vpop.f32.mrb[0].mxu0
    %v188 = vadd.f32 %v90, %v187
    %189 = vdwg.mxu0
    %190 = vmatprep.subr.bf16.mxu0 %v130
    %191 = vmatpush1.bf16.msra.mxu0 %v129
    %192 = vmatprep.subr.bf16.mxu0 %v134
    %193 = vmatpush1.bf16.msra.mxu0 %v133
    %194 = vmatprep.subr.bf16.mxu0 0
    %195 = vmatpush1.bf16.msra.mxu0 0
    %196 = vmatprep.subr.bf16.mxu0 0
    %197 = vmatpush1.bf16.msra.mxu0 0
    %198 = vmatprep.subr.bf16.mxu0 0
    %199 = vmatpush1.bf16.msra.mxu0 0
    %200 = vmatprep.subr.bf16.mxu0 0
    %201 = vmatpush1.bf16.msra.mxu0 0
    %202 = vmatprep.subr.bf16.mxu0 0
    %203 = vmatpush1.bf16.msra.mxu0 0
    %204 = vmatprep.subr.bf16.mxu0 0
    %205 = vmatpush1.bf16.msra.mxu0 0
    %206 = vmatprep.subr.bf16.mxu0 0
    %207 = vmatpush1.bf16.msra.mxu0 0
    %208 = vmatprep.subr.bf16.mxu0 0
    %209 = vmatpush1.bf16.msra.mxu0 0
    %210 = vmatprep.subr.bf16.mxu0 0
    %211 = vmatpush1.bf16.msra.mxu0 0
    %212 = vmatprep.subr.bf16.mxu0 0
    %213 = vmatpush1.bf16.msra.mxu0 0
    %214 = vmatprep.subr.bf16.mxu0 0
    %215 = vmatpush1.bf16.msra.mxu0 0
    %216 = vmatprep.subr.bf16.mxu0 0
    %217 = vmatpush1.bf16.msra.mxu0 0
    %218 = vmatprep.subr.bf16.mxu0 0
    %219 = vmatpush1.bf16.msra.mxu0 0
    %220 = vmatprep.subr.bf16.mxu0 0
    %221 = vmatpush1.bf16.msra.mxu0 0
    %222 = vmatprep.mubr.bf16.mxu0 0
    %223 = vmatmul.mubr.bf16.gmra.mrb[0].mxu0 %v145
    %v224 = vpop.f32.mrb[0].mxu0
    %v225 = vadd.f32 %v94, %v224
    %v226 = vpop.f32.mrb[0].mxu0
    %v227 = vadd.f32 %v98, %v226
    %v228 = vpop.f32.mrb[0].mxu0
    %v229 = vadd.f32 %v94, %v228
    %v230 = vpop.f32.mrb[0].mxu0
    %v231 = vadd.f32 %v98, %v230
    %232 = vdwg.mxu0
    %v233 = vmax.f32 %v182, 0.0
    %v234 = vmax.f32 %v184, 0.0
    %v235 = vmax.f32 %v225, 0.0
    %v236 = vmax.f32 %v227, 0.0
    %v237 = vmax.f32 %v186, 0.0
    %v238 = vmax.f32 %v188, 0.0
    %v239 = vmax.f32 %v229, 0.0
    %v240 = vmax.f32 %v231, 0.0
    %v241 = vpack.c.bf16 %v237, %v233
    %v242 = vpack.c.bf16 %v238, %v234
    %v243 = vpack.c.bf16 %v239, %v235
    %v244 = vpack.c.bf16 %v240, %v236
    %v245 = vld [vmem:[#allocation4] sm:$0xf]
    %v246 = vld [vmem:[#allocation4 + $0x4] sm:$0xf]
    %v247 = vld [vmem:[#allocation4 + $0x8] sm:$0xf]
    %v248 = vld [vmem:[#allocation4 + $0xc] sm:$0xf]
    %v249 = vld [vmem:[#allocation4 + $0x10] sm:$0xf]
    %v250 = vld [vmem:[#allocation4 + $0x14] sm:$0xf]
    %v251 = vld [vmem:[#allocation4 + $0x18] sm:$0xf]
    %v252 = vld [vmem:[#allocation4 + $0x1c] sm:$0xf]
    %v253 = vld [vmem:[#allocation4 + $0x20] sm:$0xf]
    %v254 = vld [vmem:[#allocation4 + $0x24] sm:$0xf]
    %v255 = vld [vmem:[#allocation4 + $0x28] sm:$0xf]
    %v256 = vld [vmem:[#allocation4 + $0x2c] sm:$0xf]
    %v257 = vld [vmem:[#allocation4 + $0x30] sm:$0xf]
    %v258 = vld [vmem:[#allocation4 + $0x34] sm:$0xf]
    %v259 = vld [vmem:[#allocation4 + $0x38] sm:$0xf]
    %v260 = vld [vmem:[#allocation4 + $0x3c] sm:$0xf]
    %v261 = vld [vmem:[#allocation4 + $0x40] sm:$0xf]
    %v262 = vld [vmem:[#allocation4 + $0x44] sm:$0xf]
    %v263 = vld [vmem:[#allocation4 + $0x48] sm:$0xf]
    %v264 = vld [vmem:[#allocation4 + $0x4c] sm:$0xf]
    %v265 = vld [vmem:[#allocation4 + $0x50] sm:$0xf]
    %v266 = vld [vmem:[#allocation4 + $0x54] sm:$0xf]
    %v267 = vld [vmem:[#allocation4 + $0x58] sm:$0xf]
    %v268 = vld [vmem:[#allocation4 + $0x5c] sm:$0xf]
    %v269 = vld [vmem:[#allocation4 + $0x60] sm:$0xf]
    %v270 = vld [vmem:[#allocation4 + $0x64] sm:$0xf]
    %v271 = vld [vmem:[#allocation4 + $0x68] sm:$0xf]
    %v272 = vld [vmem:[#allocation4 + $0x6c] sm:$0xf]
    %v273 = vld [vmem:[#allocation4 + $0x70] sm:$0xf]
    %v274 = vld [vmem:[#allocation4 + $0x74] sm:$0xf]
    %v275 = vld [vmem:[#allocation4 + $0x78] sm:$0xf]
    %v276 = vld [vmem:[#allocation4 + $0x7c] sm:$0xf]
    %v277 = vld [vmem:[#allocation4 + $0x80] sm:$0xf]
    %v278 = vld [vmem:[#allocation4 + $0x84] sm:$0xf]
    %v279 = vld [vmem:[#allocation4 + $0x88] sm:$0xf]
    %v280 = vld [vmem:[#allocation4 + $0x8c] sm:$0xf]
    %v281 = vld [vmem:[#allocation4 + $0x90] sm:$0xf]
    %v282 = vld [vmem:[#allocation4 + $0x94] sm:$0xf]
    %v283 = vld [vmem:[#allocation4 + $0x98] sm:$0xf]
    %v284 = vld [vmem:[#allocation4 + $0x9c] sm:$0xf]
    %v285 = vld [vmem:[#allocation4 + $0xa0] sm:$0xf]
    %v286 = vld [vmem:[#allocation4 + $0xa4] sm:$0xf]
    %v287 = vld [vmem:[#allocation4 + $0xa8] sm:$0xf]
    %v288 = vld [vmem:[#allocation4 + $0xac] sm:$0xf]
    %v289 = vld [vmem:[#allocation4 + $0xb0] sm:$0xf]
    %v290 = vld [vmem:[#allocation4 + $0xb4] sm:$0xf]
    %v291 = vld [vmem:[#allocation4 + $0xb8] sm:$0xf]
    %v292 = vld [vmem:[#allocation4 + $0xbc] sm:$0xf]
    %v293 = vld [vmem:[#allocation4 + $0xc0] sm:$0xf]
    %v294 = vld [vmem:[#allocation4 + $0xc4] sm:$0xf]
    %v295 = vld [vmem:[#allocation4 + $0xc8] sm:$0xf]
    %v296 = vld [vmem:[#allocation4 + $0xcc] sm:$0xf]
    %v297 = vld [vmem:[#allocation4 + $0xd0] sm:$0xf]
    %v298 = vld [vmem:[#allocation4 + $0xd4] sm:$0xf]
    %v299 = vld [vmem:[#allocation4 + $0xd8] sm:$0xf]
    %v300 = vld [vmem:[#allocation4 + $0xdc] sm:$0xf]
    %v301 = vld [vmem:[#allocation4 + $0xe0] sm:$0xf]
    %v302 = vld [vmem:[#allocation4 + $0xe4] sm:$0xf]
    %v303 = vld [vmem:[#allocation4 + $0xe8] sm:$0xf]
    %v304 = vld [vmem:[#allocation4 + $0xec] sm:$0xf]
    %v305 = vld [vmem:[#allocation4 + $0xf0] sm:$0xf]
    %v306 = vld [vmem:[#allocation4 + $0xf4] sm:$0xf]
    %v307 = vld [vmem:[#allocation4 + $0xf8] sm:$0xf]
    %v308 = vld [vmem:[#allocation4 + $0xfc] sm:$0xf]
    %v309 = vld [vmem:[%s4] sm:$0x1]
    %v311 = vlaneseq
    %v312 = vshrl.u32 %v311, 7
    %v313 = vsub.s32 0, %v312
    %v314 = vrot.slane %v309, %v313
    %v380 = vunpack.c.l.b16 %v245
    %v381 = vunpack.c.l.b16 %v246
    %v382 = vunpack.c.l.b16 %v247
    %v383 = vunpack.c.l.b16 %v248
    %v384 = vunpack.c.l.b16 %v249
    %v385 = vunpack.c.l.b16 %v250
    %v386 = vunpack.c.l.b16 %v251
    %v387 = vunpack.c.l.b16 %v252
    %v388 = vunpack.c.l.b16 %v253
    %v389 = vunpack.c.l.b16 %v254
    %v390 = vunpack.c.l.b16 %v255
    %v391 = vunpack.c.l.b16 %v256
    %v392 = vunpack.c.l.b16 %v257
    %v393 = vunpack.c.l.b16 %v258
    %v394 = vunpack.c.l.b16 %v259
    %v395 = vunpack.c.l.b16 %v260
    %v396 = vunpack.c.l.b16 %v261
    %v397 = vunpack.c.l.b16 %v262
    %v398 = vunpack.c.l.b16 %v263
    %v399 = vunpack.c.l.b16 %v264
    %v400 = vunpack.c.l.b16 %v265
    %v401 = vunpack.c.l.b16 %v266
    %v402 = vunpack.c.l.b16 %v267
    %v403 = vunpack.c.l.b16 %v268
    %v404 = vunpack.c.l.b16 %v269
    %v405 = vunpack.c.l.b16 %v270
    %v406 = vunpack.c.l.b16 %v271
    %v407 = vunpack.c.l.b16 %v272
    %v408 = vunpack.c.l.b16 %v273
    %v409 = vunpack.c.l.b16 %v274
    %v410 = vunpack.c.l.b16 %v275
    %v411 = vunpack.c.l.b16 %v276
    %v412 = vunpack.c.l.b16 %v277
    %v413 = vunpack.c.l.b16 %v278
    %v414 = vunpack.c.l.b16 %v279
    %v415 = vunpack.c.l.b16 %v280
    %v416 = vunpack.c.l.b16 %v281
    %v417 = vunpack.c.l.b16 %v282
    %v418 = vunpack.c.l.b16 %v283
    %v419 = vunpack.c.l.b16 %v284
    %v420 = vunpack.c.l.b16 %v285
    %v421 = vunpack.c.l.b16 %v286
    %v422 = vunpack.c.l.b16 %v287
    %v423 = vunpack.c.l.b16 %v288
    %v424 = vunpack.c.l.b16 %v289
    %v425 = vunpack.c.l.b16 %v290
    %v426 = vunpack.c.l.b16 %v291
    %v427 = vunpack.c.l.b16 %v292
    %v428 = vunpack.c.l.b16 %v293
    %v429 = vunpack.c.l.b16 %v294
    %v430 = vunpack.c.l.b16 %v295
    %v431 = vunpack.c.l.b16 %v296
    %v432 = vunpack.c.l.b16 %v297
    %v433 = vunpack.c.l.b16 %v298
    %v434 = vunpack.c.l.b16 %v299
    %v435 = vunpack.c.l.b16 %v300
    %v436 = vunpack.c.l.b16 %v301
    %v437 = vunpack.c.l.b16 %v302
    %v438 = vunpack.c.l.b16 %v303
    %v439 = vunpack.c.l.b16 %v304
    %v440 = vunpack.c.l.b16 %v305
    %v441 = vunpack.c.l.b16 %v306
    %v442 = vunpack.c.l.b16 %v307
    %v443 = vunpack.c.l.b16 %v308
    %v444 = vpack.c.b16 %v381, %v380
    %v445 = vpack.c.b16 %v383, %v382
    %v446 = vpack.c.b16 %v385, %v384
    %v447 = vpack.c.b16 %v387, %v386
    %v448 = vpack.c.b16 %v389, %v388
    %v449 = vpack.c.b16 %v391, %v390
    %v450 = vpack.c.b16 %v393, %v392
    %v451 = vpack.c.b16 %v395, %v394
    %v452 = vpack.c.b16 %v397, %v396
    %v453 = vpack.c.b16 %v399, %v398
    %v454 = vpack.c.b16 %v401, %v400
    %v455 = vpack.c.b16 %v403, %v402
    %v456 = vpack.c.b16 %v405, %v404
    %v457 = vpack.c.b16 %v407, %v406
    %v458 = vpack.c.b16 %v409, %v408
    %v459 = vpack.c.b16 %v411, %v410
    %v460 = vpack.c.b16 %v413, %v412
    %v461 = vpack.c.b16 %v415, %v414
    %v462 = vpack.c.b16 %v417, %v416
    %v463 = vpack.c.b16 %v419, %v418
    %v464 = vpack.c.b16 %v421, %v420
    %v465 = vpack.c.b16 %v423, %v422
    %v466 = vpack.c.b16 %v425, %v424
    %v467 = vpack.c.b16 %v427, %v426
    %v468 = vpack.c.b16 %v429, %v428
    %v469 = vpack.c.b16 %v431, %v430
    %v470 = vpack.c.b16 %v433, %v432
    %v471 = vpack.c.b16 %v435, %v434
    %v472 = vpack.c.b16 %v437, %v436
    %v473 = vpack.c.b16 %v439, %v438
    %v474 = vpack.c.b16 %v441, %v440
    %v475 = vpack.c.b16 %v443, %v442
    %508 = vmatprep.subr.bf16.mxu0 0
    %509 = vmatpush1.bf16.msra.mxu0 %v444
    %510 = vmatprep.subr.bf16.mxu0 0
    %511 = vmatpush1.bf16.msra.mxu0 %v445
    %512 = vmatprep.subr.bf16.mxu0 0
    %513 = vmatpush1.bf16.msra.mxu0 %v446
    %514 = vmatprep.subr.bf16.mxu0 0
    %515 = vmatpush1.bf16.msra.mxu0 %v447
    %516 = vmatprep.subr.bf16.mxu0 0
    %517 = vmatpush1.bf16.msra.mxu0 %v448
    %518 = vmatprep.subr.bf16.mxu0 0
    %519 = vmatpush1.bf16.msra.mxu0 %v449
    %520 = vmatprep.subr.bf16.mxu0 0
    %521 = vmatpush1.bf16.msra.mxu0 %v450
    %522 = vmatprep.subr.bf16.mxu0 0
    %523 = vmatpush1.bf16.msra.mxu0 %v451
    %524 = vmatprep.subr.bf16.mxu0 0
    %525 = vmatpush1.bf16.msra.mxu0 %v452
    %526 = vmatprep.subr.bf16.mxu0 0
    %527 = vmatpush1.bf16.msra.mxu0 %v453
    %528 = vmatprep.subr.bf16.mxu0 0
    %529 = vmatpush1.bf16.msra.mxu0 %v454
    %530 = vmatprep.subr.bf16.mxu0 0
    %531 = vmatpush1.bf16.msra.mxu0 %v455
    %532 = vmatprep.subr.bf16.mxu0 0
    %533 = vmatpush1.bf16.msra.mxu0 %v456
    %534 = vmatprep.subr.bf16.mxu0 0
    %535 = vmatpush1.bf16.msra.mxu0 %v457
    %536 = vmatprep.subr.bf16.mxu0 0
    %537 = vmatpush1.bf16.msra.mxu0 %v458
    %538 = vmatprep.subr.bf16.mxu0 0
    %539 = vmatpush1.bf16.msra.mxu0 %v459
    %540 = vmatprep.mubr.bf16.mxu0 %v242
    %541 = vmatmul.mubr.bf16.gmra.mrb[0].mxu0 %v241
    %v542 = vpop.f32.mrb[0].mxu0
    %v543 = vadd.f32 %v314, %v542
    %v544 = vpop.f32.mrb[0].mxu0
    %v545 = vpop.f32.mrb[0].mxu0
    %v546 = vadd.f32 %v314, %v545
    %v547 = vpop.f32.mrb[0].mxu0
    %548 = vdwg.mxu0
    %549 = vmatprep.subr.bf16.mxu0 0
    %550 = vmatpush1.bf16.msra.mxu0 %v460
    %551 = vmatprep.subr.bf16.mxu0 0
    %552 = vmatpush1.bf16.msra.mxu0 %v461
    %553 = vmatprep.subr.bf16.mxu0 0
    %554 = vmatpush1.bf16.msra.mxu0 %v462
    %555 = vmatprep.subr.bf16.mxu0 0
    %556 = vmatpush1.bf16.msra.mxu0 %v463
    %557 = vmatprep.subr.bf16.mxu0 0
    %558 = vmatpush1.bf16.msra.mxu0 %v464
    %559 = vmatprep.subr.bf16.mxu0 0
    %560 = vmatpush1.bf16.msra.mxu0 %v465
    %561 = vmatprep.subr.bf16.mxu0 0
    %562 = vmatpush1.bf16.msra.mxu0 %v466
    %563 = vmatprep.subr.bf16.mxu0 0
    %564 = vmatpush1.bf16.msra.mxu0 %v467
    %565 = vmatprep.subr.bf16.mxu0 0
    %566 = vmatpush1.bf16.msra.mxu0 %v468
    %567 = vmatprep.subr.bf16.mxu0 0
    %568 = vmatpush1.bf16.msra.mxu0 %v469
    %569 = vmatprep.subr.bf16.mxu0 0
    %570 = vmatpush1.bf16.msra.mxu0 %v470
    %571 = vmatprep.subr.bf16.mxu0 0
    %572 = vmatpush1.bf16.msra.mxu0 %v471
    %573 = vmatprep.subr.bf16.mxu0 0
    %574 = vmatpush1.bf16.msra.mxu0 %v472
    %575 = vmatprep.subr.bf16.mxu0 0
    %576 = vmatpush1.bf16.msra.mxu0 %v473
    %577 = vmatprep.subr.bf16.mxu0 0
    %578 = vmatpush1.bf16.msra.mxu0 %v474
    %579 = vmatprep.subr.bf16.mxu0 0
    %580 = vmatpush1.bf16.msra.mxu0 %v475
    %581 = vmatprep.mubr.bf16.mxu0 %v244
    %582 = vmatmul.mubr.bf16.gmra.mrb[0].mxu0 %v243
    %v583 = vpop.f32.mrb[0].mxu0
    %v584 = vadd.f32 %v543, %v583
    %v585 = vpop.f32.mrb[0].mxu0
    %v586 = vpop.f32.mrb[0].mxu0
    %v587 = vadd.f32 %v546, %v586
    %v588 = vpop.f32.mrb[0].mxu0
    %589 = vdwg.mxu0
    %v590 = vmax.f32 %v584, 0.0
    %v591 = vmax.f32 %v587, 0.0
    %v592 = vpack.c.bf16 %v591, %v590
    %v593 = vld [vmem:[%s5] sm:$0xf]
    %v594 = vld [vmem:[%s5 + $0x4] sm:$0xf]
    %v595 = vld [vmem:[%s5 + $0x8] sm:$0xf]
    %v596 = vld [vmem:[%s5 + $0xc] sm:$0xf]
    %v597 = vld [vmem:[%s5 + $0x10] sm:$0xf]
    %v598 = vld [vmem:[%s5 + $0x14] sm:$0xf]
    %v599 = vld [vmem:[%s5 + $0x18] sm:$0xf]
    %v600 = vld [vmem:[%s5 + $0x1c] sm:$0xf]
    %v601 = vld [vmem:[%s5 + $0x20] sm:$0xf]
    %v602 = vld [vmem:[%s5 + $0x24] sm:$0xf]
    %v603 = vld [vmem:[%s5 + $0x28] sm:$0xf]
    %v604 = vld [vmem:[%s5 + $0x2c] sm:$0xf]
    %v605 = vld [vmem:[%s5 + $0x30] sm:$0xf]
    %v606 = vld [vmem:[%s5 + $0x34] sm:$0xf]
    %v607 = vld [vmem:[%s5 + $0x38] sm:$0xf]
    %v608 = vld [vmem:[%s5 + $0x3c] sm:$0xf]
    %v609 = vld [vmem:[%s6] sm:$0x1]
    %v611 = vlaneseq
    %v612 = vshrl.u32 %v611, 7
    %v613 = vsub.s32 0, %v612
    %v614 = vrot.slane %v609, %v613
    %v632 = vunpack.c.l.b16 %v593
    %v633 = vunpack.c.l.b16 %v594
    %v634 = vunpack.c.l.b16 %v595
    %v635 = vunpack.c.l.b16 %v596
    %v636 = vunpack.c.l.b16 %v597
    %v637 = vunpack.c.l.b16 %v598
    %v638 = vunpack.c.l.b16 %v599
    %v639 = vunpack.c.l.b16 %v600
    %v640 = vunpack.c.l.b16 %v601
    %v641 = vunpack.c.l.b16 %v602
    %v642 = vunpack.c.l.b16 %v603
    %v643 = vunpack.c.l.b16 %v604
    %v644 = vunpack.c.l.b16 %v605
    %v645 = vunpack.c.l.b16 %v606
    %v646 = vunpack.c.l.b16 %v607
    %v647 = vunpack.c.l.b16 %v608
    %v648 = vpack.c.b16 %v633, %v632
    %v649 = vpack.c.b16 %v635, %v634
    %v650 = vpack.c.b16 %v637, %v636
    %v651 = vpack.c.b16 %v639, %v638
    %v652 = vpack.c.b16 %v641, %v640
    %v653 = vpack.c.b16 %v643, %v642
    %v654 = vpack.c.b16 %v645, %v644
    %v655 = vpack.c.b16 %v647, %v646
    %664 = vmatprep.subr.bf16.mxu0 0
    %665 = vmatpush1.bf16.msra.mxu0 %v648
    %666 = vmatprep.subr.bf16.mxu0 0
    %667 = vmatpush1.bf16.msra.mxu0 %v649
    %668 = vmatprep.subr.bf16.mxu0 0
    %669 = vmatpush1.bf16.msra.mxu0 %v650
    %670 = vmatprep.subr.bf16.mxu0 0
    %671 = vmatpush1.bf16.msra.mxu0 %v651
    %672 = vmatprep.subr.bf16.mxu0 0
    %673 = vmatpush1.bf16.msra.mxu0 %v652
    %674 = vmatprep.subr.bf16.mxu0 0
    %675 = vmatpush1.bf16.msra.mxu0 %v653
    %676 = vmatprep.subr.bf16.mxu0 0
    %677 = vmatpush1.bf16.msra.mxu0 %v654
    %678 = vmatprep.subr.bf16.mxu0 0
    %679 = vmatpush1.bf16.msra.mxu0 %v655
    %680 = vmatprep.subr.bf16.mxu0 0
    %681 = vmatpush1.bf16.msra.mxu0 0
    %682 = vmatprep.subr.bf16.mxu0 0
    %683 = vmatpush1.bf16.msra.mxu0 0
    %684 = vmatprep.subr.bf16.mxu0 0
    %685 = vmatpush1.bf16.msra.mxu0 0
    %686 = vmatprep.subr.bf16.mxu0 0
    %687 = vmatpush1.bf16.msra.mxu0 0
    %688 = vmatprep.subr.bf16.mxu0 0
    %689 = vmatpush1.bf16.msra.mxu0 0
    %690 = vmatprep.subr.bf16.mxu0 0
    %691 = vmatpush1.bf16.msra.mxu0 0
    %692 = vmatprep.subr.bf16.mxu0 0
    %693 = vmatpush1.bf16.msra.mxu0 0
    %694 = vmatprep.subr.bf16.mxu0 0
    %695 = vmatpush1.bf16.msra.mxu0 0
    %696 = vmatprep.mubr.bf16.mxu0 0
    %697 = vmatmul.mubr.bf16.gmra.mrb[0].mxu0 %v592
    %v698 = vpop.f32.mrb[0].mxu0
    %v699 = vadd.f32 %v614, %v698
    %v700 = vpop.f32.mrb[0].mxu0
    %v701 = vpop.f32.mrb[0].mxu0
    %v702 = vadd.f32 %v614, %v701
    %v703 = vpop.f32.mrb[0].mxu0
    %704 = vdwg.mxu0
    %v705 = vmax.f32 %v699, 0.0
    %v706 = vmax.f32 %v702, 0.0
    %v707 = vpack.c.bf16 %v706, %v705
    %v708 = vld [vmem:[%s7] sm:$0xf]
    %v709 = vld [vmem:[%s7 + $0x4] sm:$0xf]
    %v710 = vld [vmem:[%s7 + $0x8] sm:$0xf]
    %v711 = vld [vmem:[%s7 + $0xc] sm:$0xf]
    %v712 = vld [vmem:[%s7 + $0x10] sm:$0xf]
    %v713 = vld [vmem:[%s7 + $0x14] sm:$0xf]
    %v714 = vld [vmem:[%s7 + $0x18] sm:$0xf]
    %v715 = vld [vmem:[%s7 + $0x1c] sm:$0xf]
    %v716 = vld [vmem:[#allocation6] sm:$0x1]
    %v718 = vlaneseq
    %v719 = vshrl.u32 %v718, 7
    %v720 = vsub.s32 0, %v719
    %v721 = vrot.slane %v716, %v720
    %v731 = vunpack.c.l.b16 %v708
    %v732 = vunpack.c.l.b16 %v709
    %v733 = vunpack.c.l.b16 %v710
    %v734 = vunpack.c.l.b16 %v711
    %v735 = vunpack.c.l.b16 %v712
    %v736 = vunpack.c.l.b16 %v713
    %v737 = vunpack.c.l.b16 %v714
    %v738 = vunpack.c.l.b16 %v715
    %v739 = vpack.c.b16 %v732, %v731
    %v740 = vpack.c.b16 %v734, %v733
    %v741 = vpack.c.b16 %v736, %v735
    %v742 = vpack.c.b16 %v738, %v737
    %vm747 = vcmask 523264
    %v749 = vsel %vm747, %v707, 0
    %751 = vmatprep.subr.bf16.mxu0 0
    %752 = vmatpush1.bf16.msra.mxu0 %v739
    %753 = vmatprep.subr.bf16.mxu0 0
    %754 = vmatpush1.bf16.msra.mxu0 %v740
    %755 = vmatprep.subr.bf16.mxu0 0
    %756 = vmatpush1.bf16.msra.mxu0 %v741
    %757 = vmatprep.subr.bf16.mxu0 0
    %758 = vmatpush1.bf16.msra.mxu0 %v742
    %759 = vmatprep.subr.bf16.mxu0 0
    %760 = vmatpush1.bf16.msra.mxu0 0
    %761 = vmatprep.subr.bf16.mxu0 0
    %762 = vmatpush1.bf16.msra.mxu0 0
    %763 = vmatprep.subr.bf16.mxu0 0
    %764 = vmatpush1.bf16.msra.mxu0 0
    %765 = vmatprep.subr.bf16.mxu0 0
    %766 = vmatpush1.bf16.msra.mxu0 0
    %767 = vmatprep.subr.bf16.mxu0 0
    %768 = vmatpush1.bf16.msra.mxu0 0
    %769 = vmatprep.subr.bf16.mxu0 0
    %770 = vmatpush1.bf16.msra.mxu0 0
    %771 = vmatprep.subr.bf16.mxu0 0
    %772 = vmatpush1.bf16.msra.mxu0 0
    %773 = vmatprep.subr.bf16.mxu0 0
    %774 = vmatpush1.bf16.msra.mxu0 0
    %775 = vmatprep.subr.bf16.mxu0 0
    %776 = vmatpush1.bf16.msra.mxu0 0
    %777 = vmatprep.subr.bf16.mxu0 0
    %778 = vmatpush1.bf16.msra.mxu0 0
    %779 = vmatprep.subr.bf16.mxu0 0
    %780 = vmatpush1.bf16.msra.mxu0 0
    %781 = vmatprep.subr.bf16.mxu0 0
    %782 = vmatpush1.bf16.msra.mxu0 0
    %783 = vmatprep.mubr.bf16.mxu0 0
    %784 = vmatmul.mubr.bf16.gmra.mrb[0].mxu0 %v749
    %v785 = vpop.f32.mrb[0].mxu0
    %v786 = vadd.f32 %v721, %v785
    %v787 = vpop.f32.mrb[0].mxu0
    %v788 = vpop.f32.mrb[0].mxu0
    %v789 = vadd.f32 %v721, %v788
    %v790 = vpop.f32.mrb[0].mxu0
    %791 = vdwg.mxu0
    %792 = vst [vmem:[%s9] sm:$0xff] %v786
    %793 = vst [vmem:[%s9 + $0x8] sm:$0xff] %v789
    // Predicated region
    $region50: #{multiclass_classification_forward.1} parent=1 // pred_check
      _
    $region51: #{multiclass_classification_forward.1} parent=1 // pred_check_branch
      %795 = sbr.rel (0) target = $region53
    $region52: #{multiclass_classification_forward.1} parent=1 // pred_region
      _
    $region53: #{multiclass_classification_forward.1} parent=1 // pred_fallthru
      _
    // Predicated region
    $region54: #{multiclass_classification_forward.1} parent=1 // pred_check
      _
    $region55: #{multiclass_classification_forward.1} parent=1 // pred_check_branch
      %797 = sbr.rel (0) target = $region57
    $region56: #{multiclass_classification_forward.1} parent=1 // pred_region
      _
    $region57: #{multiclass_classification_forward.1} parent=1 // pred_fallthru
      _
    %798 = vsyncpa [#allocation3], 1
    %799 = vsyncpa [#allocation5], 1

</llo_original>
